<compile_context>
chip_gen: v7x
topology: tpu7x:2x2x1
jax: 0.10.0
libtpu: 0.0.40
codegen_flags: <defaults>
</compile_context>

<pallas_src>
import jax
import jax.numpy as jnp
from jax.experimental import pallas as pl
from jax.experimental.pallas import tpu as pltpu


def _round_up(a, b):
    return pl.cdiv(a, b) * b


def _proj_kernel(x_ref, w_ref, b_ref, o_ref):
    # x_ref: (TM, K) bf16 patches; w_ref: (K, E) bf16; b_ref: (1, E) f32.
    # f32 accumulation on the MXU, f32 bias add, narrow store.
    acc = jnp.dot(x_ref[...], w_ref[...], preferred_element_type=jnp.float32)
    o_ref[...] = (acc + b_ref[...]).astype(o_ref.dtype)


def _pick_tile_m(M, row, max_tile):
    """Largest TM <= max_tile that divides M exactly, covers whole patch rows
    (multiple of `row` = Wp) and is sublane-friendly (multiple of 16).
    Returns None if no such tile exists (caller falls back to padding)."""
    if M <= max_tile:
        return M  # single full-extent tile: always a legal block shape
    n_rows = M // row
    for hb in range(min(n_rows, max(1, max_tile // row)), 0, -1):
        if n_rows % hb == 0 and (hb * row) % 16 == 0:
            return hb * row
    return None


def patch_embed_forward(x, weight, bias, patch_size=(4, 4), *,
                        tile_m=8192, out_format="NCHW",
                        out_dtype=jnp.bfloat16):
    """x: (B, C, H, W); weight: (E, C, ph, pw); bias: (E,).

    out_format="NCHW" matches the PyTorch module exactly (costs one extra
    full-HBM transpose pass); "NLC" returns (B, Hp*Wp, E), which is what the
    next Swin stage consumes, and skips that pass.
    """
    ph, pw = patch_size
    B, C, H, W = x.shape
    E = weight.shape[0]

    # F.pad semantics from the module: pad right (W) and bottom (H) only.
    pad_h = (-H) % ph
    pad_w = (-W) % pw
    if pad_h or pad_w:
        x = jnp.pad(x, ((0, 0), (0, 0), (0, pad_h), (0, pad_w)))
    H2, W2 = H + pad_h, W + pad_w
    Hp, Wp = H2 // ph, W2 // pw

    K = C * ph * pw
    M = B * Hp * Wp

    # Single fused XLA pass: f32 NCHW -> bf16 im2col patches (M, K).
    # K ordering is (c, kh, kw), matching Conv2d weight (E, C, ph, pw) flatten.
    patches = (
        x.astype(jnp.bfloat16)
        .reshape(B, C, Hp, ph, Wp, pw)
        .transpose(0, 2, 4, 1, 3, 5)
        .reshape(M, K)
    )

    w_mat = weight.reshape(E, K).T.astype(jnp.bfloat16)   # (K, E)
    b_mat = bias.astype(jnp.float32).reshape(1, E)

    # Tile M so TM divides M exactly (no padded rows, no post-kernel slice).
    TM = _pick_tile_m(M, Wp, max(tile_m, Wp))
    if TM is None:
        # Fallback (rare shapes): pad M to a 16-aligned tile, slice off after.
        TM = min(_round_up(tile_m, 16), _round_up(M, 16))
        Mp = _round_up(M, TM)
        patches = jnp.pad(patches, ((0, Mp - M), (0, 0)))
    else:
        Mp = M

    grid = (Mp // TM,)
    out_itemsize = jnp.dtype(out_dtype).itemsize

    out = pl.pallas_call(
        _proj_kernel,
        out_shape=jax.ShapeDtypeStruct((Mp, E), out_dtype),
        grid_spec=pl.GridSpec(
            grid=grid,
            in_specs=[
                pl.BlockSpec((TM, K), lambda i: (i, 0)),   # patches tile
                pl.BlockSpec((K, E), lambda i: (0, 0)),    # weight, resident
                pl.BlockSpec((1, E), lambda i: (0, 0)),    # bias, resident
            ],
            out_specs=pl.BlockSpec((TM, E), lambda i: (i, 0)),
        ),
        compiler_params=pltpu.CompilerParams(
            dimension_semantics=("parallel",),
            vmem_limit_bytes=32 * 1024 * 1024,
        ),
        cost_estimate=pl.CostEstimate(
            flops=2 * Mp * K * E,
            transcendentals=0,
            bytes_accessed=Mp * K * 2 + K * E * 2 + E * 4 + Mp * E * out_itemsize,
        ),
    )(patches, w_mat, b_mat)

    if Mp != M:
        out = out[:M]
    tokens = out.reshape(B, Hp, Wp, E)

    if out_format == "NLC":
        # (B, Hp*Wp, E): skips the extra full-HBM NCHW transpose.
        return tokens.reshape(B, Hp * Wp, E)
    if out_format == "NCHW":
        # Exactly the PyTorch module's layout (extra HBM transpose pass).
        return tokens.transpose(0, 3, 1, 2)
    raise ValueError(f"unknown out_format: {out_format}")


def _reference_conv(x, weight, bias, patch_size=(4, 4)):
    ph, pw = patch_size
    _, _, H, W = x.shape
    pad_h = (-H) % ph
    pad_w = (-W) % pw
    if pad_h or pad_w:
        x = jnp.pad(x, ((0, 0), (0, 0), (0, pad_h), (0, pad_w)))
    y = jax.lax.conv_general_dilated(
        x, weight, window_strides=(ph, pw), padding="VALID",
        dimension_numbers=("NCHW", "OIHW", "NCHW"),
    )
    return y + bias.reshape(1, -1, 1, 1)


if __name__ == "__main__":
    # Small shapes consistent with the module: B=2, in_chans=4, H=W=16,
    # patch_size=4, embed_dim=32.
    B, C, H, W = 2, 4, 16, 16
    patch = (4, 4)
    E = 32

    key = jax.random.PRNGKey(0)
    kx, kw, kb = jax.random.split(key, 3)
    x = jax.random.normal(kx, (B, C, H, W), dtype=jnp.float32)
    weight = jax.random.normal(kw, (E, C, patch[0], patch[1]),
                               dtype=jnp.float32) * 0.02
    bias = jax.random.normal(kb, (E,), dtype=jnp.float32) * 0.02

    out = jax.block_until_ready(patch_embed_forward(x, weight, bias, patch))
    assert out.shape == (B, E, H // patch[0], W // patch[1])
    assert out.dtype == jnp.bfloat16
    out_f32 = out.astype(jnp.float32)

    # Tight check: reference with the same bf16 input rounding (f32 accumulate).
    ref_bf16 = jax.block_until_ready(_reference_conv(
        x.astype(jnp.bfloat16).astype(jnp.float32),
        weight.astype(jnp.bfloat16).astype(jnp.float32), bias, patch))
    # Loose sanity check against the full-f32 conv.
    ref_f32 = jax.block_until_ready(_reference_conv(x, weight, bias, patch))
    assert ref_f32.shape == out.shape
    assert jnp.allclose(out_f32, ref_bf16, atol=2e-2, rtol=2e-2)
    assert jnp.allclose(out_f32, ref_f32, atol=5e-2, rtol=5e-2)

    # NLC path (skips the NCHW transpose) must match the NCHW output exactly.
    out_nlc = jax.block_until_ready(
        patch_embed_forward(x, weight, bias, patch, out_format="NLC"))
    assert out_nlc.shape == (B, (H // patch[0]) * (W // patch[1]), E)
    assert jnp.array_equal(
        out_nlc, jnp.transpose(out, (0, 2, 3, 1)).reshape(B, -1, E))

    # Second case: exercises the module's right/bottom F.pad path (H, W not
    # multiples of the patch size) and a small, non-16-divisible M.
    B2, C2, H2, W2, E2 = 1, 3, 18, 18, 32
    kx2, kw2, kb2 = jax.random.split(jax.random.PRNGKey(1), 3)
    x2 = jax.random.normal(kx2, (B2, C2, H2, W2), dtype=jnp.float32)
    w2 = jax.random.normal(kw2, (E2, C2, patch[0], patch[1]),
                           dtype=jnp.float32) * 0.02
    b2 = jax.random.normal(kb2, (E2,), dtype=jnp.float32) * 0.02
    out2 = jax.block_until_ready(patch_embed_forward(x2, w2, b2, patch))
    ref2 = jax.block_until_ready(_reference_conv(
        x2.astype(jnp.bfloat16).astype(jnp.float32),
        w2.astype(jnp.bfloat16).astype(jnp.float32), b2, patch))
    assert out2.shape == ref2.shape == (B2, E2, 5, 5)
    assert jnp.allclose(out2.astype(jnp.float32), ref2, atol=2e-2, rtol=2e-2)

    print("KERNEL_OK")
</pallas_src>

<mosaic_0001>
module attributes {stable_mosaic.version = 11 : i64} {
  func.func @_proj_kernel(%arg0: i32, %arg1: memref<32x64xbf16, #tpu.memory_space<vmem>>, %arg2: memref<64x32xbf16, #tpu.memory_space<vmem>>, %arg3: memref<1x32xf32, #tpu.memory_space<vmem>>, %arg4: memref<32x32xbf16, #tpu.memory_space<vmem>>) attributes {dimension_semantics = [#tpu.dimension_semantics<parallel>], iteration_bounds = array<i64: 1>, scalar_prefetch = 0 : i64, scratch_operands = 0 : i64, tpu.core_type = #tpu.core_type<tc>, window_params = [{transform_indices = @transform_0, window_bounds = array<i64: 32, 64>}, {pipeline_mode = #tpu.pipeline_mode<synchronous>, transform_indices = @transform_1, window_bounds = array<i64: 64, 32>}, {pipeline_mode = #tpu.pipeline_mode<synchronous>, transform_indices = @transform_2, window_bounds = array<i64: 1, 32>}, {transform_indices = @transform_3, window_bounds = array<i64: 32, 32>}]} {
    %c0 = arith.constant 0 : index
    %c0_0 = arith.constant 0 : index
    %0 = vector.load %arg1[%c0, %c0_0] : memref<32x64xbf16, #tpu.memory_space<vmem>>, vector<32x64xbf16>
    %c0_1 = arith.constant 0 : index
    %c0_2 = arith.constant 0 : index
    %1 = vector.load %arg2[%c0_1, %c0_2] : memref<64x32xbf16, #tpu.memory_space<vmem>>, vector<64x32xbf16>
    %cst = arith.constant dense<0.000000e+00> : vector<32x32xf32>
    %2 = tpu.matmul %0, %1, %cst {dimension_numbers = #tpu.dot_dimension_numbers<[1], [0], [0], [1], [0, 0, 1, 1], [], []>} : vector<32x64xbf16>, vector<64x32xbf16>, vector<32x32xf32> -> vector<32x32xf32>
    %c0_3 = arith.constant 0 : index
    %c0_4 = arith.constant 0 : index
    %3 = vector.load %arg3[%c0_3, %c0_4] : memref<1x32xf32, #tpu.memory_space<vmem>>, vector<1x32xf32>
    %4 = vector.broadcast %3 : vector<1x32xf32> to vector<32x32xf32>
    %5 = arith.addf %2, %4 : vector<32x32xf32>
    %6 = arith.truncf %5 : vector<32x32xf32> to vector<32x32xbf16>
    %c0_5 = arith.constant 0 : index
    %c0_6 = arith.constant 0 : index
    %7 = vector.load %arg4[%c0_5, %c0_6] : memref<32x32xbf16, #tpu.memory_space<vmem>>, vector<32x32xbf16>
    tpu.vector_store %arg4[%c0_5, %c0_6], %6 {strides = array<i32>} : memref<32x32xbf16, #tpu.memory_space<vmem>>, vector<32x32xbf16>,
    return
  }
  func.func @transform_0(%arg0: i32) -> (i32, i32) {
    %c0_i32 = arith.constant 0 : i32
    %c0_i32_0 = arith.constant 0 : i32
    return %arg0, %c0_i32 : i32, i32
  }
  func.func @transform_1(%arg0: i32) -> (i32, i32) {
    %c0_i32 = arith.constant 0 : i32
    %c0_i32_0 = arith.constant 0 : i32
    %c0_i32_1 = arith.constant 0 : i32
    return %c0_i32, %c0_i32_0 : i32, i32
  }
  func.func @transform_2(%arg0: i32) -> (i32, i32) {
    %c0_i32 = arith.constant 0 : i32
    %c0_i32_0 = arith.constant 0 : i32
    %c0_i32_1 = arith.constant 0 : i32
    return %c0_i32, %c0_i32_0 : i32, i32
  }
  func.func @transform_3(%arg0: i32) -> (i32, i32) {
    %c0_i32 = arith.constant 0 : i32
    %c0_i32_0 = arith.constant 0 : i32
    return %arg0, %c0_i32 : i32, i32
  }
}

</mosaic_0001>

<llo_original>
// kernel: tpu_custom_call.1
$region0: #{tpu_custom_call.1}
  #allocation0 [shape = 'u32[]', space=smem, size = 0x4, offset = 0x4, fixed_abs, tag = 'smem constant byte address 0x4 - core index']
  #allocation1 [shape = 'u32[144,128]{1,0:T(1,128)}', space=vmem, size = 0x12000, scoped, tag = 'internal scratch']
  %s0 = inlined_call_operand.vmem [shape: bf16[32,64], index: 0, kind: input, shape index: {}]
  %s1 = inlined_call_operand.vmem [shape: bf16[64,32], index: 1, kind: input, shape index: {}]
  %s2 = inlined_call_operand.vmem [shape: f32[1,32], index: 2, kind: input, shape index: {}]
  %s3 = inlined_call_operand.hbm [shape: bf16[32,32], index: 3, kind: output, shape index: {}]
  %s4 = sld [smem:[#allocation0]]
  $region22: #{tpu_custom_call.1} parent=0
    _
  %s6 = ssub.s32 1, %s4
  %s7 = scalar_select 0, %s6, %s4
  $region1: #{tpu_custom_call.1} parent=0
    #allocation2 [shape = 'u8[8192]{0}', space=vmem, size = 0x2000, scoped, tag = 'output window, operand 0, single buffered']
    #allocation3 [shape = 's32[1]{0}', space=sflag, size = 0x4, scoped, tag = 'scoped memory for tpu_custom_call.1']
    %8 = vsyncpa [#allocation3], 0
    // Predicated region
    $region2: #{tpu_custom_call.1} parent=1 // pred_check
      _
    $region3: #{tpu_custom_call.1} parent=1 // pred_check_branch
      %10 = sbr.rel (0) target = $region5
    $region4: #{tpu_custom_call.1} parent=1 // pred_region
      _
    $region5: #{tpu_custom_call.1} parent=1 // pred_fallthru
      _
    // Predicated region
    $region6: #{tpu_custom_call.1} parent=1 // pred_check
      _
    $region7: #{tpu_custom_call.1} parent=1 // pred_check_branch
      %12 = sbr.rel (0) target = $region9
    $region8: #{tpu_custom_call.1} parent=1 // pred_region
      _
    $region9: #{tpu_custom_call.1} parent=1 // pred_fallthru
      _
    // Predicated region
    $region10: #{tpu_custom_call.1} parent=1 // pred_check
      _
    $region11: #{tpu_custom_call.1} parent=1 // pred_check_branch
      %14 = sbr.rel (0) target = $region13
    $region12: #{tpu_custom_call.1} parent=1 // pred_region
      _
    $region13: #{tpu_custom_call.1} parent=1 // pred_fallthru
      _
    %v16 = vld [vmem:[%s0] sm:$0xf]
    %v17 = vld [vmem:[%s0 + $0x4] sm:$0xf]
    %v18 = vld [vmem:[%s0 + $0x8] sm:$0xf]
    %v19 = vld [vmem:[%s0 + $0xc] sm:$0xf]
    %v20 = vld [vmem:[%s1] sm:$0xf]
    %v21 = vld [vmem:[%s1 + $0x4] sm:$0xf]
    %v22 = vld [vmem:[%s1 + $0x8] sm:$0xf]
    %v23 = vld [vmem:[%s1 + $0xc] sm:$0xf]
    %v24 = vld [vmem:[%s1 + $0x10] sm:$0xf]
    %v25 = vld [vmem:[%s1 + $0x14] sm:$0xf]
    %v26 = vld [vmem:[%s1 + $0x18] sm:$0xf]
    %v27 = vld [vmem:[%s1 + $0x1c] sm:$0xf]
    %v28 = vld [vmem:[%s2] sm:$0x1]
    %v30 = vlaneseq
    %v31 = vshrl.u32 %v30, 7
    %v32 = vsub.s32 0, %v31
    %v33 = vrot.slane %v28, %v32
    %v39 = vunpack.c.l.b16 %v16
    %v40 = vunpack.c.l.b16 %v17
    %v41 = vunpack.c.l.b16 %v18
    %v42 = vunpack.c.l.b16 %v19
    %v43 = vpack.c.b16 %v40, %v39
    %v44 = vpack.c.b16 %v42, %v41
    %v53 = vunpack.c.l.b16 %v20
    %v54 = vunpack.c.l.b16 %v21
    %v55 = vunpack.c.l.b16 %v22
    %v56 = vunpack.c.l.b16 %v23
    %v57 = vunpack.c.l.b16 %v24
    %v58 = vunpack.c.l.b16 %v25
    %v59 = vunpack.c.l.b16 %v26
    %v60 = vunpack.c.l.b16 %v27
    %v61 = vpack.c.b16 %v54, %v53
    %v62 = vpack.c.b16 %v56, %v55
    %v63 = vpack.c.b16 %v58, %v57
    %v64 = vpack.c.b16 %v60, %v59
    %vm69 = vcmask 523264
    %v71 = vsel %vm69, %v43, 0
    %v74 = vsel %vm69, %v44, 0
    %76 = vmatprep.subr.bf16.mxu0 0
    %77 = vmatpush1.bf16.msra.mxu0 %v61
    %78 = vmatprep.subr.bf16.mxu0 0
    %79 = vmatpush1.bf16.msra.mxu0 %v62
    %80 = vmatprep.subr.bf16.mxu0 0
    %81 = vmatpush1.bf16.msra.mxu0 %v63
    %82 = vmatprep.subr.bf16.mxu0 0
    %83 = vmatpush1.bf16.msra.mxu0 %v64
    %84 = vmatprep.subr.bf16.mxu0 0
    %85 = vmatpush1.bf16.msra.mxu0 0
    %86 = vmatprep.subr.bf16.mxu0 0
    %87 = vmatpush1.bf16.msra.mxu0 0
    %88 = vmatprep.subr.bf16.mxu0 0
    %89 = vmatpush1.bf16.msra.mxu0 0
    %90 = vmatprep.subr.bf16.mxu0 0
    %91 = vmatpush1.bf16.msra.mxu0 0
    %92 = vmatprep.subr.bf16.mxu0 0
    %93 = vmatpush1.bf16.msra.mxu0 0
    %94 = vmatprep.subr.bf16.mxu0 0
    %95 = vmatpush1.bf16.msra.mxu0 0
    %96 = vmatprep.subr.bf16.mxu0 0
    %97 = vmatpush1.bf16.msra.mxu0 0
    %98 = vmatprep.subr.bf16.mxu0 0
    %99 = vmatpush1.bf16.msra.mxu0 0
    %100 = vmatprep.subr.bf16.mxu0 0
    %101 = vmatpush1.bf16.msra.mxu0 0
    %102 = vmatprep.subr.bf16.mxu0 0
    %103 = vmatpush1.bf16.msra.mxu0 0
    %104 = vmatprep.subr.bf16.mxu0 0
    %105 = vmatpush1.bf16.msra.mxu0 0
    %106 = vmatprep.subr.bf16.mxu0 0
    %107 = vmatpush1.bf16.msra.mxu0 0
    %108 = vmatprep.mubr.bf16.mxu0 0
    %109 = vmatmul.mubr.bf16.gmra.mrb[0].mxu0 %v71
    %v110 = vpop.f32.mrb[0].mxu0
    %v111 = vadd.f32 %v33, %v110
    %v112 = vpop.f32.mrb[0].mxu0
    %v113 = vpop.f32.mrb[0].mxu0
    %v114 = vadd.f32 %v33, %v113
    %v115 = vpop.f32.mrb[0].mxu0
    %116 = vmatprep.mubr.bf16.mxu0 0
    %117 = vmatmul.mubr.bf16.gmra.mrb[0].mxu0 %v74
    %v118 = vpop.f32.mrb[0].mxu0
    %v119 = vadd.f32 %v33, %v118
    %v120 = vpop.f32.mrb[0].mxu0
    %v121 = vpop.f32.mrb[0].mxu0
    %v122 = vadd.f32 %v33, %v121
    %v123 = vpop.f32.mrb[0].mxu0
    %124 = vdwg.mxu0
    %v125 = vpack.c.bf16 %v114, %v111
    %v126 = vpack.c.bf16 %v122, %v119
    %v129 = vunpack.c.l.b16 %v125
    %v130 = vunpack.c.h.b16 %v125
    %v131 = vunpack.c.l.b16 %v126
    %v132 = vunpack.c.h.b16 %v126
    %v133 = vpack.c.b16 %v129, %v129
    %v134 = vpack.c.b16 %v130, %v130
    %v135 = vpack.c.b16 %v131, %v131
    %v136 = vpack.c.b16 %v132, %v132
    %vm141 = vcmask 257024
    %142 = vst.msk [vmem:[#allocation2] sm:$0xf] %vm141, %v133
    %143 = vst.msk [vmem:[#allocation2 + $0x4] sm:$0xf] %vm141, %v134
    %144 = vst.msk [vmem:[#allocation2 + $0x8] sm:$0xf] %vm141, %v135
    %145 = vst.msk [vmem:[#allocation2 + $0xc] sm:$0xf] %vm141, %v136
    // Predicated region
    $region14: #{tpu_custom_call.1} parent=1 // pred_check
      _
    $region15: #{tpu_custom_call.1} parent=1 // pred_check_branch
      %147 = sbr.rel (0) target = $region17
    $region16: #{tpu_custom_call.1} parent=1 // pred_region
      %s149 = ssub.s32 256, 256
      %150 = vsyncadd [#allocation3], %s149
      %s151 = sshll.u32 [#allocation2], 4
      %s152 = int_to_ptr.vmem [resolvable:$true] %s151
      %157 = dma.vmem_to_hbm [thread:$0]  %s152, 256, %s3, [#allocation3], 64, 64, 4
    $region17: #{tpu_custom_call.1} parent=1 // pred_fallthru
      _
    // Predicated region
    $region18: #{tpu_custom_call.1} parent=1 // pred_check
      _
    $region19: #{tpu_custom_call.1} parent=1 // pred_check_branch
      %159 = sbr.rel (0) target = $region21
    $region20: #{tpu_custom_call.1} parent=1 // pred_region
      %160 = dma.done [#allocation3], 256
    $region21: #{tpu_custom_call.1} parent=1 // pred_fallthru
      _
    %161 = vsyncpa [#allocation3], 1

</llo_original>
